<compile_context>
chip_gen: v7x
topology: tpu7x:2x2x1
jax: 0.10.0
libtpu: 0.0.40
codegen_flags: <defaults>
</compile_context>

<pallas_src>
import jax
import jax.numpy as jnp
from jax.experimental import pallas as pl
from jax.experimental.pallas import tpu as pltpu


def _round_up(n, m):
    return ((n + m - 1) // m) * m


def _batch_index_map(i):
    # x / out tiles walk the batch dimension.
    return (i, 0)


def _replicated_index_map(i):
    # Weights: same (only) block for every grid step -> VMEM resident.
    return (0, 0)


def _vmem_capacity_bytes():
    try:
        return int(pltpu.get_tpu_info().vmem_capacity_bytes)
    except Exception:
        return 64 << 20  # conservative fallback: v7x has 64 MiB per TensorCore


def _mlp_kernel(*refs):
    """refs = (x_ref, w0_ref, ..., wL_ref, o_ref).

    h = x
    for every weight but the last:  h = relu(h @ W_i)   (f32 accumulation)
    out = h @ W_last                (no activation on the final layer)
    """
    x_ref = refs[0]
    w_refs = refs[1:-1]
    o_ref = refs[-1]

    n_w = len(w_refs)
    h = x_ref[...]
    for i, w_ref in enumerate(w_refs):
        w = w_ref[...]
        if h.dtype != w.dtype:
            h = h.astype(w.dtype)      # bf16 MXU path: cast f32 acc -> bf16
        h = jnp.dot(h, w, preferred_element_type=jnp.float32)
        if i < n_w - 1:
            h = jnp.maximum(h, 0.0)    # ReLU (pure VPU, on the f32 accumulator)
    o_ref[...] = h.astype(o_ref.dtype)


def prepare_weights(weights, compute_dtype=jnp.float32):
    """Cast weights once at model-setup time (avoids per-call HBM re-casts)."""
    compute_dtype = jnp.dtype(compute_dtype)
    return [w if w.dtype == compute_dtype else w.astype(compute_dtype)
            for w in weights]


def tab_transform_net(x, weights, *, compute_dtype=jnp.float32,
                      batch_tile=None, out_dtype=None):
    """Pallas forward pass of TabTransformNet.

    x:        (batch, x_dim) array.
    weights:  list of (in_dim, out_dim) arrays (PyTorch nn.Linear.weight is
              (out, in); transpose it), applied left-to-right with ReLU between
              all but the last layer.
    compute_dtype: dtype fed to the MXU (f32, or bf16 with f32 accumulation).
    batch_tile: optional override of the batch tile size (multiple of 8).
    out_dtype: output dtype (defaults to x.dtype).
    """
    if x.ndim != 2:
        raise ValueError(f"x must be 2-D (batch, x_dim), got {x.shape}")
    batch, x_dim = int(x.shape[0]), int(x.shape[1])

    weights = list(weights)
    prev = x_dim
    for li, w in enumerate(weights):
        if w.ndim != 2 or int(w.shape[0]) != prev:
            raise ValueError(
                f"weights[{li}] has shape {tuple(w.shape)}; expected "
                f"({prev}, out_dim). Pass weights as (in_dim, out_dim), i.e. "
                "the transpose of PyTorch nn.Linear.weight.")
        prev = int(w.shape[1])
    out_dim = prev

    if out_dtype is None:
        out_dtype = x.dtype
    compute_dtype = jnp.dtype(compute_dtype)
    comp_item = compute_dtype.itemsize
    out_item = jnp.dtype(out_dtype).itemsize

    # Cast streamed / resident operands at the call boundary.  For repeated
    # calls with a non-f32 compute dtype, pre-cast the weights once with
    # prepare_weights() so this is a no-op here.
    x_in = x if x.dtype == compute_dtype else x.astype(compute_dtype)
    weights_c = [w if w.dtype == compute_dtype else w.astype(compute_dtype)
                 for w in weights]

    dims = [x_dim] + [int(w.shape[1]) for w in weights_c]
    max_dim = max(dims)
    weight_bytes = sum(int(w.size) for w in weights_c) * comp_item

    capacity = _vmem_capacity_bytes()
    budget = int(0.65 * capacity)   # ~83 MiB on v5e/v6e (128 MiB), ~41 MiB on v7x

    def vmem_needed(tb, weight_factor):
        stream = 2 * tb * x_dim * comp_item + 2 * tb * out_dim * out_item
        live_h = 2 * tb * max_dim * 4        # f32 intermediates inside the kernel
        return stream + live_h + weight_factor * weight_bytes

    # Resident weights must fit no matter how small the batch tile gets.
    if vmem_needed(8, 1) > budget:
        # TODO(synk): stream weights over a layer/K grid axis instead of keeping
        # them VMEM-resident when h_dim * num_layers is this large.
        raise ValueError(
            f"resident weights ({weight_bytes / 2**20:.1f} MiB) do not fit the "
            f"VMEM budget ({budget / 2**20:.1f} MiB); reduce h_dim/num_layers "
            "or use a lower-precision compute_dtype.")

    if batch_tile is not None:
        if batch_tile <= 0 or batch_tile % 8 != 0:
            raise ValueError("batch_tile must be a positive multiple of 8")
        tb = int(batch_tile)
    else:
        # Target ~4 MiB of streamed x+out bytes per grid step so the ~0.35 us
        # per-step pipeline overhead is <10% of the DMA time; then clamp by the
        # batch size, the >=2-steps rule (v7x megacore) and the VMEM budget.
        row_bytes = x_dim * comp_item + out_dim * out_item
        tb = _round_up(max(512, (4 << 20) // max(row_bytes, 1)), 8)
        tb = min(tb, 1 << 16)
        tb = min(tb, _round_up(batch, 8))
        if batch >= 16:
            tb = min(tb, _round_up(pl.cdiv(batch, 2), 8))
        while tb > 8 and vmem_needed(tb, 1) > budget:
            tb = max(8, _round_up(tb // 2, 8))

    num_steps = pl.cdiv(batch, tb)

    flops = 2 * batch * sum(a * b for a, b in zip(dims[:-1], dims[1:]))
    bytes_accessed = (batch * x_dim * comp_item + weight_bytes
                      + batch * out_dim * out_item)
    cost = pl.CostEstimate(flops=flops, transcendentals=0,
                           bytes_accessed=bytes_accessed)

    # Leave headroom over the worst case (double-buffered-weights fallback).
    vmem_limit = int(min(capacity, 100 << 20,
                         max(int(1.25 * vmem_needed(tb, 2)), 32 << 20)))

    def run(single_buffer_weights):
        in_specs = [pl.BlockSpec((tb, x_dim), _batch_index_map)]
        for w in weights_c:
            shape = (int(w.shape[0]), int(w.shape[1]))
            if single_buffer_weights:
                in_specs.append(pl.BlockSpec(shape, _replicated_index_map,
                                             pipeline_mode=pl.Buffered(1)))
            else:
                in_specs.append(pl.BlockSpec(shape, _replicated_index_map))
        return pl.pallas_call(
            _mlp_kernel,
            out_shape=jax.ShapeDtypeStruct((batch, out_dim), out_dtype),
            grid=(num_steps,),
            in_specs=in_specs,
            out_specs=pl.BlockSpec((tb, out_dim), _batch_index_map),
            compiler_params=pltpu.CompilerParams(
                dimension_semantics=("parallel",),   # shard batch across TCs
                vmem_limit_bytes=vmem_limit),
            cost_estimate=cost,
        )(x_in, *weights_c)

    try:
        return run(True)
    except Exception:
        # Some jax/libtpu combinations reject single-buffered (Buffered(1))
        # operands in the top-level pipeline; fall back to default buffering.
        return run(False)


def init_weights(key, x_dim, h_dim, num_layers):
    """Deterministic synthetic weights matching TabTransformNet.__init__ shapes.

    Layer i (i < num_layers-1): Linear(input_dim -> h_dim, bias=False)
    Last layer:                 Linear(input_dim -> x_dim, bias=False)
    Stored as (in_dim, out_dim) for direct h @ W in the kernel.
    """
    weights = []
    input_dim = x_dim
    for _ in range(num_layers - 1):
        key, sub = jax.random.split(key)
        weights.append(jax.random.normal(sub, (input_dim, h_dim), jnp.float32)
                       * (1.0 / jnp.sqrt(input_dim)))
        input_dim = h_dim
    key, sub = jax.random.split(key)
    weights.append(jax.random.normal(sub, (input_dim, x_dim), jnp.float32)
                   * (1.0 / jnp.sqrt(input_dim)))
    return weights


def reference_forward(x, weights):
    """Pure-JAX reference (mirrors the PyTorch nn.Sequential)."""
    h = x
    for i, w in enumerate(weights):
        h = jnp.dot(h, w, precision="highest")
        if i < len(weights) - 1:
            h = jnp.maximum(h, 0.0)
    return h


if __name__ == "__main__":
    # Small shapes consistent with the module: tabular input of x_dim features.
    batch = 64
    x_dim = 16
    h_dim = 32
    num_layers = 3  # Linear(16,32) ReLU Linear(32,32) ReLU Linear(32,16)

    key = jax.random.PRNGKey(0)
    key, xkey = jax.random.split(key)
    x = jax.random.normal(xkey, (batch, x_dim), jnp.float32)
    weights = init_weights(key, x_dim, h_dim, num_layers)

    ref = reference_forward(x, weights)

    # f32 path, auto-chosen batch tile (>=2 grid steps, weights VMEM-resident).
    out = jax.block_until_ready(tab_transform_net(x, weights))
    assert out.shape == (batch, x_dim), out.shape
    assert jnp.allclose(out, ref, atol=1e-4, rtol=1e-4), (
        float(jnp.max(jnp.abs(out - ref))))

    # Ragged batch -> exercises the partial last grid block (no batch padding
    # or padded x copy is materialized in HBM).
    x_r = x[:53]
    ref_r = reference_forward(x_r, weights)
    out_r = jax.block_until_ready(tab_transform_net(x_r, weights))
    assert out_r.shape == (53, x_dim), out_r.shape
    assert jnp.allclose(out_r, ref_r, atol=1e-4, rtol=1e-4), (
        float(jnp.max(jnp.abs(out_r - ref_r))))

    # Forced small batch tile -> multi-step grid (pipelined x/out DMA, weight
    # residency across grid iterations).
    out_tiled = jax.block_until_ready(
        tab_transform_net(x, weights, batch_tile=16))
    assert jnp.allclose(out_tiled, ref, atol=1e-4, rtol=1e-4), (
        float(jnp.max(jnp.abs(out_tiled - ref))))

    # bf16-operand / f32-accumulate MXU path; x streamed as bf16, weights
    # pre-cast once.  Error compounds with depth -> loose tolerance.
    w_bf16 = prepare_weights(weights, jnp.bfloat16)
    out_bf16 = jax.block_until_ready(
        tab_transform_net(x, w_bf16, compute_dtype=jnp.bfloat16))
    assert jnp.allclose(out_bf16, ref, atol=1e-1, rtol=1e-1), (
        float(jnp.max(jnp.abs(out_bf16 - ref))))

    print("KERNEL_OK")
</pallas_src>

<mosaic_0001>
module attributes {stable_mosaic.version = 11 : i64} {
  func.func @_mlp_kernel(%arg0: i32, %arg1: memref<32x16xf32, #tpu.memory_space<vmem>>, %arg2: memref<16x32xf32, #tpu.memory_space<vmem>>, %arg3: memref<32x32xf32, #tpu.memory_space<vmem>>, %arg4: memref<32x16xf32, #tpu.memory_space<vmem>>, %arg5: memref<32x16xf32, #tpu.memory_space<vmem>>) attributes {dimension_semantics = [#tpu.dimension_semantics<parallel>], iteration_bounds = array<i64: 2>, scalar_prefetch = 0 : i64, scratch_operands = 0 : i64, tpu.core_type = #tpu.core_type<tc>, window_params = [{transform_indices = @transform_0, window_bounds = array<i64: 32, 16>}, {pipeline_mode = #tpu.pipeline_mode<synchronous>, transform_indices = @transform_1, window_bounds = array<i64: 16, 32>}, {pipeline_mode = #tpu.pipeline_mode<synchronous>, transform_indices = @transform_2, window_bounds = array<i64: 32, 32>}, {pipeline_mode = #tpu.pipeline_mode<synchronous>, transform_indices = @transform_3, window_bounds = array<i64: 32, 16>}, {transform_indices = @transform_4, window_bounds = array<i64: 32, 16>}]} {
    %c0 = arith.constant 0 : index
    %c0_0 = arith.constant 0 : index
    %0 = vector.load %arg1[%c0, %c0_0] : memref<32x16xf32, #tpu.memory_space<vmem>>, vector<32x16xf32>
    %c0_1 = arith.constant 0 : index
    %c0_2 = arith.constant 0 : index
    %1 = vector.load %arg2[%c0_1, %c0_2] : memref<16x32xf32, #tpu.memory_space<vmem>>, vector<16x32xf32>
    %cst = arith.constant dense<0.000000e+00> : vector<32x32xf32>
    %2 = tpu.matmul %0, %1, %cst {dimension_numbers = #tpu.dot_dimension_numbers<[1], [0], [0], [1], [0, 0, 1, 1], [], []>} : vector<32x16xf32>, vector<16x32xf32>, vector<32x32xf32> -> vector<32x32xf32>
    %cst_3 = arith.constant 0.000000e+00 : f32
    %3 = vector.broadcast %cst_3 : f32 to vector<32x32xf32>
    %4 = arith.maximumf %2, %3 : vector<32x32xf32>
    %c0_4 = arith.constant 0 : index
    %c0_5 = arith.constant 0 : index
    %5 = vector.load %arg3[%c0_4, %c0_5] : memref<32x32xf32, #tpu.memory_space<vmem>>, vector<32x32xf32>
    %cst_6 = arith.constant dense<0.000000e+00> : vector<32x32xf32>
    %6 = tpu.matmul %4, %5, %cst_6 {dimension_numbers = #tpu.dot_dimension_numbers<[1], [0], [0], [1], [0, 0, 1, 1], [], []>} : vector<32x32xf32>, vector<32x32xf32>, vector<32x32xf32> -> vector<32x32xf32>
    %cst_7 = arith.constant 0.000000e+00 : f32
    %7 = vector.broadcast %cst_7 : f32 to vector<32x32xf32>
    %8 = arith.maximumf %6, %7 : vector<32x32xf32>
    %c0_8 = arith.constant 0 : index
    %c0_9 = arith.constant 0 : index
    %9 = vector.load %arg4[%c0_8, %c0_9] : memref<32x16xf32, #tpu.memory_space<vmem>>, vector<32x16xf32>
    %cst_10 = arith.constant dense<0.000000e+00> : vector<32x16xf32>
    %10 = tpu.matmul %8, %9, %cst_10 {dimension_numbers = #tpu.dot_dimension_numbers<[1], [0], [0], [1], [0, 0, 1, 1], [], []>} : vector<32x32xf32>, vector<32x16xf32>, vector<32x16xf32> -> vector<32x16xf32>
    %c0_11 = arith.constant 0 : index
    %c0_12 = arith.constant 0 : index
    %11 = vector.load %arg5[%c0_11, %c0_12] : memref<32x16xf32, #tpu.memory_space<vmem>>, vector<32x16xf32>
    tpu.vector_store %arg5[%c0_11, %c0_12], %10 {strides = array<i32>} : memref<32x16xf32, #tpu.memory_space<vmem>>, vector<32x16xf32>,
    return
  }
  func.func @transform_0(%arg0: i32) -> (i32, i32) {
    %c0_i32 = arith.constant 0 : i32
    %c0_i32_0 = arith.constant 0 : i32
    return %arg0, %c0_i32 : i32, i32
  }
  func.func @transform_1(%arg0: i32) -> (i32, i32) {
    %c0_i32 = arith.constant 0 : i32
    %c0_i32_0 = arith.constant 0 : i32
    %c0_i32_1 = arith.constant 0 : i32
    return %c0_i32, %c0_i32_0 : i32, i32
  }
  func.func @transform_2(%arg0: i32) -> (i32, i32) {
    %c0_i32 = arith.constant 0 : i32
    %c0_i32_0 = arith.constant 0 : i32
    %c0_i32_1 = arith.constant 0 : i32
    return %c0_i32, %c0_i32_0 : i32, i32
  }
  func.func @transform_3(%arg0: i32) -> (i32, i32) {
    %c0_i32 = arith.constant 0 : i32
    %c0_i32_0 = arith.constant 0 : i32
    %c0_i32_1 = arith.constant 0 : i32
    return %c0_i32, %c0_i32_0 : i32, i32
  }
  func.func @transform_4(%arg0: i32) -> (i32, i32) {
    %c0_i32 = arith.constant 0 : i32
    %c0_i32_0 = arith.constant 0 : i32
    return %arg0, %c0_i32 : i32, i32
  }
}

module attributes {stable_mosaic.version = 11 : i64} {
  func.func @_mlp_kernel(%arg0: i32, %arg1: memref<32x16xf32, #tpu.memory_space<vmem>>, %arg2: memref<16x32xf32, #tpu.memory_space<vmem>>, %arg3: memref<32x32xf32, #tpu.memory_space<vmem>>, %arg4: memref<32x16xf32, #tpu.memory_space<vmem>>, %arg5: memref<32x16xf32, #tpu.memory_space<vmem>>) attributes {dimension_semantics = [#tpu.dimension_semantics<parallel>], iteration_bounds = array<i64: 2>, scalar_prefetch = 0 : i64, scratch_operands = 0 : i64, tpu.core_type = #tpu.core_type<tc>, window_params = [{transform_indices = @transform_0, window_bounds = array<i64: 32, 16>}, {pipeline_mode = #tpu.pipeline_mode<synchronous>, transform_indices = @transform_1, window_bounds = array<i64: 16, 32>}, {pipeline_mode = #tpu.pipeline_mode<synchronous>, transform_indices = @transform_2, window_bounds = array<i64: 32, 32>}, {pipeline_mode = #tpu.pipeline_mode<synchronous>, transform_indices = @transform_3, window_bounds = array<i64: 32, 16>}, {transform_indices = @transform_4, window_bounds = array<i64: 32, 16>}]} {
    %c0 = arith.constant 0 : index
    %c0_0 = arith.constant 0 : index
    %0 = vector.load %arg1[%c0, %c0_0] : memref<32x16xf32, #tpu.memory_space<vmem>>, vector<32x16xf32>
    %c0_1 = arith.constant 0 : index
    %c0_2 = arith.constant 0 : index
    %1 = vector.load %arg2[%c0_1, %c0_2] : memref<16x32xf32, #tpu.memory_space<vmem>>, vector<16x32xf32>
    %cst = arith.constant dense<0.000000e+00> : vector<32x32xf32>
    %2 = tpu.matmul %0, %1, %cst {dimension_numbers = #tpu.dot_dimension_numbers<[1], [0], [0], [1], [0, 0, 1, 1], [], []>} : vector<32x16xf32>, vector<16x32xf32>, vector<32x32xf32> -> vector<32x32xf32>
    %cst_3 = arith.constant 0.000000e+00 : f32
    %3 = vector.broadcast %cst_3 : f32 to vector<32x32xf32>
    %4 = arith.maximumf %2, %3 : vector<32x32xf32>
    %c0_4 = arith.constant 0 : index
    %c0_5 = arith.constant 0 : index
    %5 = vector.load %arg3[%c0_4, %c0_5] : memref<32x32xf32, #tpu.memory_space<vmem>>, vector<32x32xf32>
    %cst_6 = arith.constant dense<0.000000e+00> : vector<32x32xf32>
    %6 = tpu.matmul %4, %5, %cst_6 {dimension_numbers = #tpu.dot_dimension_numbers<[1], [0], [0], [1], [0, 0, 1, 1], [], []>} : vector<32x32xf32>, vector<32x32xf32>, vector<32x32xf32> -> vector<32x32xf32>
    %cst_7 = arith.constant 0.000000e+00 : f32
    %7 = vector.broadcast %cst_7 : f32 to vector<32x32xf32>
    %8 = arith.maximumf %6, %7 : vector<32x32xf32>
    %c0_8 = arith.constant 0 : index
    %c0_9 = arith.constant 0 : index
    %9 = vector.load %arg4[%c0_8, %c0_9] : memref<32x16xf32, #tpu.memory_space<vmem>>, vector<32x16xf32>
    %cst_10 = arith.constant dense<0.000000e+00> : vector<32x16xf32>
    %10 = tpu.matmul %8, %9, %cst_10 {dimension_numbers = #tpu.dot_dimension_numbers<[1], [0], [0], [1], [0, 0, 1, 1], [], []>} : vector<32x32xf32>, vector<32x16xf32>, vector<32x16xf32> -> vector<32x16xf32>
    %c0_11 = arith.constant 0 : index
    %c0_12 = arith.constant 0 : index
    %11 = vector.load %arg5[%c0_11, %c0_12] : memref<32x16xf32, #tpu.memory_space<vmem>>, vector<32x16xf32>
    tpu.vector_store %arg5[%c0_11, %c0_12], %10 {strides = array<i32>} : memref<32x16xf32, #tpu.memory_space<vmem>>, vector<32x16xf32>,
    return
  }
  func.func @transform_0(%arg0: i32) -> (i32, i32) {
    %c0_i32 = arith.constant 0 : i32
    %c0_i32_0 = arith.constant 0 : i32
    return %arg0, %c0_i32 : i32, i32
  }
  func.func @transform_1(%arg0: i32) -> (i32, i32) {
    %c0_i32 = arith.constant 0 : i32
    %c0_i32_0 = arith.constant 0 : i32
    %c0_i32_1 = arith.constant 0 : i32
    return %c0_i32, %c0_i32_0 : i32, i32
  }
  func.func @transform_2(%arg0: i32) -> (i32, i32) {
    %c0_i32 = arith.constant 0 : i32
    %c0_i32_0 = arith.constant 0 : i32
    %c0_i32_1 = arith.constant 0 : i32
    return %c0_i32, %c0_i32_0 : i32, i32
  }
  func.func @transform_3(%arg0: i32) -> (i32, i32) {
    %c0_i32 = arith.constant 0 : i32
    %c0_i32_0 = arith.constant 0 : i32
    %c0_i32_1 = arith.constant 0 : i32
    return %c0_i32, %c0_i32_0 : i32, i32
  }
  func.func @transform_4(%arg0: i32) -> (i32, i32) {
    %c0_i32 = arith.constant 0 : i32
    %c0_i32_0 = arith.constant 0 : i32
    return %arg0, %c0_i32 : i32, i32
  }
}

</mosaic_0001>

<llo_original>
// kernel: tpu_custom_call.1
$region0: #{tpu_custom_call.1}
  #allocation0 [shape = 'u32[]', space=smem, size = 0x4, offset = 0x4, fixed_abs, tag = 'smem constant byte address 0x4 - core index']
  #allocation1 [shape = 'u32[144,128]{1,0:T(1,128)}', space=vmem, size = 0x12000, scoped, tag = 'internal scratch']
  %s0 = inlined_call_operand.vmem [shape: f32[64,16], index: 0, kind: input, shape index: {}]
  %s1 = inlined_call_operand.vmem [shape: f32[16,32], index: 1, kind: input, shape index: {}]
  %s2 = inlined_call_operand.vmem [shape: f32[32,32], index: 2, kind: input, shape index: {}]
  %s3 = inlined_call_operand.vmem [shape: f32[32,16], index: 3, kind: input, shape index: {}]
  %s4 = inlined_call_operand.vmem [shape: f32[64,16], index: 4, kind: output, shape index: {}]
  %s5 = sld [smem:[#allocation0]]
  $region49: #{tpu_custom_call.1} parent=0
    _
  %s7 = ssub.s32 1, %s5
  %s8 = scalar_select 0, %s7, %s5
  loop: start=0, step=1, limit=4
  $region2: #{tpu_custom_call.1} parent=0 // loop_pre_header
    _
  $region3: #{tpu_custom_call.1} parent=0 // loop_header
    %s10 = sphi 0, %s14
    %p11 = scmp.ge.s32.totalorder %s10, 4
    %s20 = sphi 0, %s22
    %s23 = sphi 0, %s20
    %s24 = sphi 0, %s23
    %s40 = sphi 0, %s24
    %s44 = sphi 0, %s44
    %s46 = sphi 0, %s44
    %s47 = sphi 0, %s46
    %s61 = sphi 0, %s47
    %s65 = sphi 0, %s65
    %s67 = sphi 0, %s65
    %s68 = sphi 0, %s67
    %s82 = sphi 0, %s68
    %s86 = sphi 0, %s86
    %s88 = sphi 0, %s86
    %s89 = sphi 0, %s88
    %s103 = sphi 0, %s89
    %s109 = sphi 0, %s111
    %s112 = sphi 0, %s109
    %s113 = sphi 0, %s112
    %s129 = sphi 0, %s113
  $region4: #{tpu_custom_call.1} parent=0 // loop_header_branch
    %13 = sbr.rel (%p11) target = $region8
  $region5: #{tpu_custom_call.1} parent=0 // loop_body
    %s15 = ssub.s32 %s10, 1
    %s16 = ssub.s32 %s10, 2
    %s17 = sadd.s32 %s10, 1
    %s18 = ssub.s32 %s10, %s17
    %p19 = scmp.eq.s32.totalorder %s18, 0
    %s21 = sadd.s32 %s20, 1
    %s22 = scalar_select %p19, %s20, %s21
    %p25 = pneg %p19
    %p26 = scmp.eq.s32.totalorder %s10, 1
    %p27 = por %p25, %p26
    %p28 = scmp.ne.s32.totalorder %s20, %s23
    %p29 = scmp.eq.s32.totalorder %s10, 0
    %p30 = por %p28, %p29
    %p31 = scmp.ne.s32.totalorder %s20, %s23
    %p32 = scmp.eq.s32.totalorder %s15, 1
    %p33 = por %p31, %p32
    %p34 = scmp.ne.s32.totalorder %s23, %s24
    %p35 = scmp.eq.s32.totalorder %s15, 0
    %p36 = por %p34, %p35
    %p37 = scmp.ne.s32.totalorder %s23, %s24
    %p38 = scmp.eq.s32.totalorder %s16, 1
    %p39 = por %p37, %p38
    %p41 = scmp.ne.s32.totalorder %s24, %s40
    %p42 = scmp.eq.s32.totalorder %s16, 0
    %p43 = por %p41, %p42
    %s45 = sadd.s32 %s44, 1
    %p48 = scmp.eq.s32.totalorder %s10, 1
    %p49 = scmp.ne.s32.totalorder %s44, %s46
    %p50 = scmp.eq.s32.totalorder %s10, 0
    %p51 = por %p49, %p50
    %p52 = scmp.ne.s32.totalorder %s44, %s46
    %p53 = scmp.eq.s32.totalorder %s15, 1
    %p54 = por %p52, %p53
    %p55 = scmp.ne.s32.totalorder %s46, %s47
    %p56 = scmp.eq.s32.totalorder %s15, 0
    %p57 = por %p55, %p56
    %p58 = scmp.ne.s32.totalorder %s46, %s47
    %p59 = scmp.eq.s32.totalorder %s16, 1
    %p60 = por %p58, %p59
    %p62 = scmp.ne.s32.totalorder %s47, %s61
    %p63 = scmp.eq.s32.totalorder %s16, 0
    %p64 = por %p62, %p63
    %s66 = sadd.s32 %s65, 1
    %p69 = scmp.eq.s32.totalorder %s10, 1
    %p70 = scmp.ne.s32.totalorder %s65, %s67
    %p71 = scmp.eq.s32.totalorder %s10, 0
    %p72 = por %p70, %p71
    %p73 = scmp.ne.s32.totalorder %s65, %s67
    %p74 = scmp.eq.s32.totalorder %s15, 1
    %p75 = por %p73, %p74
    %p76 = scmp.ne.s32.totalorder %s67, %s68
    %p77 = scmp.eq.s32.totalorder %s15, 0
    %p78 = por %p76, %p77
    %p79 = scmp.ne.s32.totalorder %s67, %s68
    %p80 = scmp.eq.s32.totalorder %s16, 1
    %p81 = por %p79, %p80
    %p83 = scmp.ne.s32.totalorder %s68, %s82
    %p84 = scmp.eq.s32.totalorder %s16, 0
    %p85 = por %p83, %p84
    %s87 = sadd.s32 %s86, 1
    %p90 = scmp.eq.s32.totalorder %s10, 1
    %p91 = scmp.ne.s32.totalorder %s86, %s88
    %p92 = scmp.eq.s32.totalorder %s10, 0
    %p93 = por %p91, %p92
    %p94 = scmp.ne.s32.totalorder %s86, %s88
    %p95 = scmp.eq.s32.totalorder %s15, 1
    %p96 = por %p94, %p95
    %p97 = scmp.ne.s32.totalorder %s88, %s89
    %p98 = scmp.eq.s32.totalorder %s15, 0
    %p99 = por %p97, %p98
    %p100 = scmp.ne.s32.totalorder %s88, %s89
    %p101 = scmp.eq.s32.totalorder %s16, 1
    %p102 = por %p100, %p101
    %p104 = scmp.ne.s32.totalorder %s89, %s103
    %p105 = scmp.eq.s32.totalorder %s16, 0
    %p106 = por %p104, %p105
    %s107 = ssub.s32 %s10, %s17
    %p108 = scmp.eq.s32.totalorder %s107, 0
    %s110 = sadd.s32 %s109, 1
    %s111 = scalar_select %p108, %s109, %s110
    %p114 = pneg %p108
    %p115 = scmp.eq.s32.totalorder %s10, 1
    %p116 = por %p114, %p115
    %p117 = scmp.ne.s32.totalorder %s109, %s112
    %p118 = scmp.eq.s32.totalorder %s10, 0
    %p119 = por %p117, %p118
    %p120 = scmp.ne.s32.totalorder %s109, %s112
    %p121 = scmp.eq.s32.totalorder %s15, 1
    %p122 = por %p120, %p121
    %p123 = scmp.ne.s32.totalorder %s112, %s113
    %p124 = scmp.eq.s32.totalorder %s15, 0
    %p125 = por %p123, %p124
    %p126 = scmp.ne.s32.totalorder %s112, %s113
    %p127 = scmp.eq.s32.totalorder %s16, 1
    %p128 = por %p126, %p127
    %p130 = scmp.ne.s32.totalorder %s113, %s129
    %p131 = scmp.eq.s32.totalorder %s16, 0
    %p132 = por %p130, %p131
    %p133 = scmp.le.s32.totalorder 1, %s10
    %p134 = scmp.lt.s32.totalorder %s10, 3
    %p135 = pnand %p133, %p134
    %p136 = pneg %p135
    // Predicated region
    $region9: #{tpu_custom_call.1} parent=5 // pred_check
      _
    $region10: #{tpu_custom_call.1} parent=5 // pred_check_branch
      %138 = sbr.rel (%p135) target = $region12
    $region11: #{tpu_custom_call.1} parent=5 // pred_region
      %s139 = ssub.s32 %s10, 1
      // Predicated region
      $region13: #{tpu_custom_call.1} parent=11 // pred_check
        %p140 = pneg %p57
      $region14: #{tpu_custom_call.1} parent=11 // pred_check_branch
        %142 = sbr.rel (%p140) target = $region16
      $region15: #{tpu_custom_call.1} parent=11 // pred_region
        _
      $region16: #{tpu_custom_call.1} parent=11 // pred_fallthru
        _
      // Predicated region
      $region17: #{tpu_custom_call.1} parent=11 // pred_check
        %p143 = pneg %p78
      $region18: #{tpu_custom_call.1} parent=11 // pred_check_branch
        %145 = sbr.rel (%p143) target = $region20
      $region19: #{tpu_custom_call.1} parent=11 // pred_region
        _
      $region20: #{tpu_custom_call.1} parent=11 // pred_fallthru
        _
      // Predicated region
      $region21: #{tpu_custom_call.1} parent=11 // pred_check
        %p146 = pneg %p99
      $region22: #{tpu_custom_call.1} parent=11 // pred_check_branch
        %148 = sbr.rel (%p146) target = $region24
      $region23: #{tpu_custom_call.1} parent=11 // pred_region
        _
      $region24: #{tpu_custom_call.1} parent=11 // pred_fallthru
        _
    $region12: #{tpu_custom_call.1} parent=5 // pred_fallthru
      _
    %p149 = scmp.lt.s32.totalorder %s10, 2
    // Predicated region
    $region25: #{tpu_custom_call.1} parent=5 // pred_check
      %p150 = pneg %p149
    $region26: #{tpu_custom_call.1} parent=5 // pred_check_branch
      %152 = sbr.rel (%p150) target = $region28
    $region27: #{tpu_custom_call.1} parent=5 // pred_region
      // Predicated region
      $region29: #{tpu_custom_call.1} parent=27 // pred_check
        %p153 = pneg %p30
      $region30: #{tpu_custom_call.1} parent=27 // pred_check_branch
        %155 = sbr.rel (%p153) target = $region32
      $region31: #{tpu_custom_call.1} parent=27 // pred_region
        %s156 = smul.u32 4, %s10
        %p157 = scmp.lt.s32.totalorder %s156, 7
        %s158 = scalar_select %p157, %s156, 7
        %s159 = smul.addr %s158, 8
        %s160 = scalar_lea.vmem %s0, %s159
        %s161 = smul.u32 4, %s10
      $region32: #{tpu_custom_call.1} parent=27 // pred_fallthru
        _
    $region28: #{tpu_custom_call.1} parent=5 // pred_fallthru
      _
    %p162 = scmp.le.s32.totalorder 1, %s10
    %p163 = scmp.lt.s32.totalorder %s10, 3
    %p164 = pnand %p162, %p163
    %p165 = pneg %p164
    // Predicated region
    $region33: #{tpu_custom_call.1} parent=5 // pred_check
      _
    $region34: #{tpu_custom_call.1} parent=5 // pred_check_branch
      %167 = sbr.rel (%p164) target = $region36
    $region35: #{tpu_custom_call.1} parent=5 // pred_region
      %s168 = ssub.s32 %s10, 1
      %s169 = smul.u32 4, %s15
      %p170 = scmp.lt.s32.totalorder %s169, 7
      %s171 = scalar_select %p170, %s169, 7
      %s172 = smul.addr %s171, 8
      %s173 = scalar_lea.vmem %s0, %s172
      %p174 = pneg %p36
      %p175 = pneg %p33
      %p176 = pneg %p57
      %p177 = pneg %p54
      %p178 = pneg %p78
      %p179 = pneg %p75
      %p180 = pneg %p99
      %p181 = pneg %p96
      %p182 = pneg %p125
      %p183 = pneg %p122
      %s184 = smul.u32 4, %s15
      %p185 = scmp.lt.s32.totalorder %s184, 7
      %s186 = scalar_select %p185, %s184, 7
      %s187 = smul.addr %s186, 8
      %s188 = scalar_lea.vmem %s4, %s187
      %s189 = smul.u32 4, %s15
      %p190 = scmp.lt.s32.totalorder %s189, 7
      %s191 = scalar_select %p190, %s189, 7
      %s192 = smul.addr %s191, 8
      %s193 = scalar_lea.vmem %s0, %s192
      %s194 = smul.u32 4, %s15
      %s195 = smul.u32 4, %s15
      %p196 = scmp.lt.s32.totalorder %s195, 7
      %s197 = scalar_select %p196, %s195, 7
      %s198 = smul.addr %s197, 8
      %s199 = scalar_lea.vmem %s4, %s198
      %s200 = smul.u32 4, %s15
      %v201 = vld [vmem:[%s193] sm:$0xff]
      %v202 = vld [vmem:[%s193 + $0x8] sm:$0xff]
      %v203 = vld [vmem:[%s193 + $0x10] sm:$0xff]
      %v204 = vld [vmem:[%s193 + $0x18] sm:$0xff]
      %v205 = vld [vmem:[%s1] sm:$0xff]
      %v206 = vld [vmem:[%s1 + $0x8] sm:$0xff]
      %vm207 = vcmask 130048
      %v209 = vsel %vm207, %v201, 0
      %v212 = vsel %vm207, %v202, 0
      %v215 = vsel %vm207, %v203, 0
      %v218 = vsel %vm207, %v204, 0
      %220 = vmatprep.subr.mxu0 0.0
      %221 = vmatpush1.msra.mxu0 %v205
      %222 = vmatprep.subr.mxu0 0.0
      %223 = vmatpush1.msra.mxu0 %v206
      %224 = vmatprep.subr.mxu0 0.0
      %225 = vmatpush1.msra.mxu0 0.0
      %226 = vmatprep.subr.mxu0 0.0
      %227 = vmatpush1.msra.mxu0 0.0
      %228 = vmatprep.subr.mxu0 0.0
      %229 = vmatpush1.msra.mxu0 0.0
      %230 = vmatprep.subr.mxu0 0.0
      %231 = vmatpush1.msra.mxu0 0.0
      %232 = vmatprep.subr.mxu0 0.0
      %233 = vmatpush1.msra.mxu0 0.0
      %234 = vmatprep.subr.mxu0 0.0
      %235 = vmatpush1.msra.mxu0 0.0
      %236 = vmatprep.subr.mxu0 0.0
      %237 = vmatpush1.msra.mxu0 0.0
      %238 = vmatprep.subr.mxu0 0.0
      %239 = vmatpush1.msra.mxu0 0.0
      %240 = vmatprep.subr.mxu0 0.0
      %241 = vmatpush1.msra.mxu0 0.0
      %242 = vmatprep.subr.mxu0 0.0
      %243 = vmatpush1.msra.mxu0 0.0
      %244 = vmatprep.subr.mxu0 0.0
      %245 = vmatpush1.msra.mxu0 0.0
      %246 = vmatprep.subr.mxu0 0.0
      %247 = vmatpush1.msra.mxu0 0.0
      %248 = vmatprep.subr.mxu0 0.0
      %249 = vmatpush1.msra.mxu0 0.0
      %250 = vmatprep.subr.mxu0 0.0
      %251 = vmatpush1.msra.mxu0 0.0
      %252 = vmatprep.subr.mxu0 0.0
      %253 = vmatpush1.msra.mxu0 0.0
      %254 = vmatprep.subr.mxu0 0.0
      %255 = vmatpush1.msra.mxu0 0.0
      %256 = vmatprep.subr.mxu0 0.0
      %257 = vmatpush1.msra.mxu0 0.0
      %258 = vmatprep.subr.mxu0 0.0
      %259 = vmatpush1.msra.mxu0 0.0
      %260 = vmatprep.subr.mxu0 0.0
      %261 = vmatpush1.msra.mxu0 0.0
      %262 = vmatprep.subr.mxu0 0.0
      %263 = vmatpush1.msra.mxu0 0.0
      %264 = vmatprep.subr.mxu0 0.0
      %265 = vmatpush1.msra.mxu0 0.0
      %266 = vmatprep.subr.mxu0 0.0
      %267 = vmatpush1.msra.mxu0 0.0
      %268 = vmatprep.subr.mxu0 0.0
      %269 = vmatpush1.msra.mxu0 0.0
      %270 = vmatprep.subr.mxu0 0.0
      %271 = vmatpush1.msra.mxu0 0.0
      %272 = vmatprep.subr.mxu0 0.0
      %273 = vmatpush1.msra.mxu0 0.0
      %274 = vmatprep.subr.mxu0 0.0
      %275 = vmatpush1.msra.mxu0 0.0
      %276 = vmatprep.subr.mxu0 0.0
      %277 = vmatpush1.msra.mxu0 0.0
      %278 = vmatprep.subr.mxu0 0.0
      %279 = vmatpush1.msra.mxu0 0.0
      %280 = vmatprep.subr.mxu0 0.0
      %281 = vmatpush1.msra.mxu0 0.0
      %282 = vmatprep.subr.mxu0 0.0
      %283 = vmatpush1.msra.mxu0 0.0
      %284 = vmatprep.mubr.f32.mxu0 0.0
      %285 = vmatmul.mubr.f32.gmra.mrb[0].mxu0 %v209
      %v286 = vpop.f32.mrb[0].mxu0
      %v287 = vadd.f32 0.0, %v286
      %v288 = vpop.f32.mrb[0].mxu0
      %289 = vmatprep.mubr.f32.mxu0 0.0
      %290 = vmatmul.mubr.f32.gmra.mrb[0].mxu0 %v212
      %v291 = vpop.f32.mrb[0].mxu0
      %v292 = vadd.f32 0.0, %v291
      %v293 = vpop.f32.mrb[0].mxu0
      %294 = vmatprep.mubr.f32.mxu0 0.0
      %295 = vmatmul.mubr.f32.gmra.mrb[0].mxu0 %v215
      %v296 = vpop.f32.mrb[0].mxu0
      %v297 = vadd.f32 0.0, %v296
      %v298 = vpop.f32.mrb[0].mxu0
      %299 = vmatprep.mubr.f32.mxu0 0.0
      %300 = vmatmul.mubr.f32.gmra.mrb[0].mxu0 %v218
      %v301 = vpop.f32.mrb[0].mxu0
      %v302 = vadd.f32 0.0, %v301
      %v303 = vpop.f32.mrb[0].mxu0
      %304 = vdwg.mxu0
      %v305 = vmax.f32 %v287, 0.0
      %v306 = vmax.f32 %v292, 0.0
      %v307 = vmax.f32 %v297, 0.0
      %v308 = vmax.f32 %v302, 0.0
      %v309 = vld [vmem:[%s2] sm:$0xff]
      %v310 = vld [vmem:[%s2 + $0x8] sm:$0xff]
      %v311 = vld [vmem:[%s2 + $0x10] sm:$0xff]
      %v312 = vld [vmem:[%s2 + $0x18] sm:$0xff]
      %vm313 = vcmask 261120
      %v315 = vsel %vm313, %v305, 0
      %v318 = vsel %vm313, %v306, 0
      %v321 = vsel %vm313, %v307, 0
      %v324 = vsel %vm313, %v308, 0
      %326 = vmatprep.subr.mxu0 0.0
      %327 = vmatpush1.msra.mxu0 %v309
      %328 = vmatprep.subr.mxu0 0.0
      %329 = vmatpush1.msra.mxu0 %v310
      %330 = vmatprep.subr.mxu0 0.0
      %331 = vmatpush1.msra.mxu0 %v311
      %332 = vmatprep.subr.mxu0 0.0
      %333 = vmatpush1.msra.mxu0 %v312
      %334 = vmatprep.subr.mxu0 0.0
      %335 = vmatpush1.msra.mxu0 0.0
      %336 = vmatprep.subr.mxu0 0.0
      %337 = vmatpush1.msra.mxu0 0.0
      %338 = vmatprep.subr.mxu0 0.0
      %339 = vmatpush1.msra.mxu0 0.0
      %340 = vmatprep.subr.mxu0 0.0
      %341 = vmatpush1.msra.mxu0 0.0
      %342 = vmatprep.subr.mxu0 0.0
      %343 = vmatpush1.msra.mxu0 0.0
      %344 = vmatprep.subr.mxu0 0.0
      %345 = vmatpush1.msra.mxu0 0.0
      %346 = vmatprep.subr.mxu0 0.0
      %347 = vmatpush1.msra.mxu0 0.0
      %348 = vmatprep.subr.mxu0 0.0
      %349 = vmatpush1.msra.mxu0 0.0
      %350 = vmatprep.subr.mxu0 0.0
      %351 = vmatpush1.msra.mxu0 0.0
      %352 = vmatprep.subr.mxu0 0.0
      %353 = vmatpush1.msra.mxu0 0.0
      %354 = vmatprep.subr.mxu0 0.0
      %355 = vmatpush1.msra.mxu0 0.0
      %356 = vmatprep.subr.mxu0 0.0
      %357 = vmatpush1.msra.mxu0 0.0
      %358 = vmatprep.subr.mxu0 0.0
      %359 = vmatpush1.msra.mxu0 0.0
      %360 = vmatprep.subr.mxu0 0.0
      %361 = vmatpush1.msra.mxu0 0.0
      %362 = vmatprep.subr.mxu0 0.0
      %363 = vmatpush1.msra.mxu0 0.0
      %364 = vmatprep.subr.mxu0 0.0
      %365 = vmatpush1.msra.mxu0 0.0
      %366 = vmatprep.subr.mxu0 0.0
      %367 = vmatpush1.msra.mxu0 0.0
      %368 = vmatprep.subr.mxu0 0.0
      %369 = vmatpush1.msra.mxu0 0.0
      %370 = vmatprep.subr.mxu0 0.0
      %371 = vmatpush1.msra.mxu0 0.0
      %372 = vmatprep.subr.mxu0 0.0
      %373 = vmatpush1.msra.mxu0 0.0
      %374 = vmatprep.subr.mxu0 0.0
      %375 = vmatpush1.msra.mxu0 0.0
      %376 = vmatprep.subr.mxu0 0.0
      %377 = vmatpush1.msra.mxu0 0.0
      %378 = vmatprep.subr.mxu0 0.0
      %379 = vmatpush1.msra.mxu0 0.0
      %380 = vmatprep.subr.mxu0 0.0
      %381 = vmatpush1.msra.mxu0 0.0
      %382 = vmatprep.subr.mxu0 0.0
      %383 = vmatpush1.msra.mxu0 0.0
      %384 = vmatprep.subr.mxu0 0.0
      %385 = vmatpush1.msra.mxu0 0.0
      %386 = vmatprep.subr.mxu0 0.0
      %387 = vmatpush1.msra.mxu0 0.0
      %388 = vmatprep.subr.mxu0 0.0
      %389 = vmatpush1.msra.mxu0 0.0
      %390 = vmatprep.mubr.f32.mxu0 0.0
      %391 = vmatmul.mubr.f32.gmra.mrb[0].mxu0 %v315
      %v392 = vpop.f32.mrb[0].mxu0
      %v393 = vadd.f32 0.0, %v392
      %v394 = vpop.f32.mrb[0].mxu0
      %395 = vmatprep.mubr.f32.mxu0 0.0
      %396 = vmatmul.mubr.f32.gmra.mrb[0].mxu0 %v318
      %v397 = vpop.f32.mrb[0].mxu0
      %v398 = vadd.f32 0.0, %v397
      %v399 = vpop.f32.mrb[0].mxu0
      %400 = vmatprep.mubr.f32.mxu0 0.0
      %401 = vmatmul.mubr.f32.gmra.mrb[0].mxu0 %v321
      %v402 = vpop.f32.mrb[0].mxu0
      %v403 = vadd.f32 0.0, %v402
      %v404 = vpop.f32.mrb[0].mxu0
      %405 = vmatprep.mubr.f32.mxu0 0.0
      %406 = vmatmul.mubr.f32.gmra.mrb[0].mxu0 %v324
      %v407 = vpop.f32.mrb[0].mxu0
      %v408 = vadd.f32 0.0, %v407
      %v409 = vpop.f32.mrb[0].mxu0
      %410 = vdwg.mxu0
      %v411 = vmax.f32 %v393, 0.0
      %v412 = vmax.f32 %v398, 0.0
      %v413 = vmax.f32 %v403, 0.0
      %v414 = vmax.f32 %v408, 0.0
      %v415 = vld [vmem:[%s3] sm:$0xff]
      %v416 = vld [vmem:[%s3 + $0x8] sm:$0xff]
      %v417 = vld [vmem:[%s3 + $0x10] sm:$0xff]
      %v418 = vld [vmem:[%s3 + $0x18] sm:$0xff]
      %v420 = vsel %vm313, %v411, 0
      %v423 = vsel %vm313, %v412, 0
      %v426 = vsel %vm313, %v413, 0
      %v429 = vsel %vm313, %v414, 0
      %431 = vmatprep.subr.mxu0 0.0
      %432 = vmatpush1.msra.mxu0 %v415
      %433 = vmatprep.subr.mxu0 0.0
      %434 = vmatpush1.msra.mxu0 %v416
      %435 = vmatprep.subr.mxu0 0.0
      %436 = vmatpush1.msra.mxu0 %v417
      %437 = vmatprep.subr.mxu0 0.0
      %438 = vmatpush1.msra.mxu0 %v418
      %439 = vmatprep.subr.mxu0 0.0
      %440 = vmatpush1.msra.mxu0 0.0
      %441 = vmatprep.subr.mxu0 0.0
      %442 = vmatpush1.msra.mxu0 0.0
      %443 = vmatprep.subr.mxu0 0.0
      %444 = vmatpush1.msra.mxu0 0.0
      %445 = vmatprep.subr.mxu0 0.0
      %446 = vmatpush1.msra.mxu0 0.0
      %447 = vmatprep.subr.mxu0 0.0
      %448 = vmatpush1.msra.mxu0 0.0
      %449 = vmatprep.subr.mxu0 0.0
      %450 = vmatpush1.msra.mxu0 0.0
      %451 = vmatprep.subr.mxu0 0.0
      %452 = vmatpush1.msra.mxu0 0.0
      %453 = vmatprep.subr.mxu0 0.0
      %454 = vmatpush1.msra.mxu0 0.0
      %455 = vmatprep.subr.mxu0 0.0
      %456 = vmatpush1.msra.mxu0 0.0
      %457 = vmatprep.subr.mxu0 0.0
      %458 = vmatpush1.msra.mxu0 0.0
      %459 = vmatprep.subr.mxu0 0.0
      %460 = vmatpush1.msra.mxu0 0.0
      %461 = vmatprep.subr.mxu0 0.0
      %462 = vmatpush1.msra.mxu0 0.0
      %463 = vmatprep.subr.mxu0 0.0
      %464 = vmatpush1.msra.mxu0 0.0
      %465 = vmatprep.subr.mxu0 0.0
      %466 = vmatpush1.msra.mxu0 0.0
      %467 = vmatprep.subr.mxu0 0.0
      %468 = vmatpush1.msra.mxu0 0.0
      %469 = vmatprep.subr.mxu0 0.0
      %470 = vmatpush1.msra.mxu0 0.0
      %471 = vmatprep.subr.mxu0 0.0
      %472 = vmatpush1.msra.mxu0 0.0
      %473 = vmatprep.subr.mxu0 0.0
      %474 = vmatpush1.msra.mxu0 0.0
      %475 = vmatprep.subr.mxu0 0.0
      %476 = vmatpush1.msra.mxu0 0.0
      %477 = vmatprep.subr.mxu0 0.0
      %478 = vmatpush1.msra.mxu0 0.0
      %479 = vmatprep.subr.mxu0 0.0
      %480 = vmatpush1.msra.mxu0 0.0
      %481 = vmatprep.subr.mxu0 0.0
      %482 = vmatpush1.msra.mxu0 0.0
      %483 = vmatprep.subr.mxu0 0.0
      %484 = vmatpush1.msra.mxu0 0.0
      %485 = vmatprep.subr.mxu0 0.0
      %486 = vmatpush1.msra.mxu0 0.0
      %487 = vmatprep.subr.mxu0 0.0
      %488 = vmatpush1.msra.mxu0 0.0
      %489 = vmatprep.subr.mxu0 0.0
      %490 = vmatpush1.msra.mxu0 0.0
      %491 = vmatprep.subr.mxu0 0.0
      %492 = vmatpush1.msra.mxu0 0.0
      %493 = vmatprep.subr.mxu0 0.0
      %494 = vmatpush1.msra.mxu0 0.0
      %495 = vmatprep.mubr.f32.mxu0 0.0
      %496 = vmatmul.mubr.f32.gmra.mrb[0].mxu0 %v420
      %v497 = vpop.f32.mrb[0].mxu0
      %v498 = vadd.f32 0.0, %v497
      %v499 = vpop.f32.mrb[0].mxu0
      %500 = vmatprep.mubr.f32.mxu0 0.0
      %501 = vmatmul.mubr.f32.gmra.mrb[0].mxu0 %v423
      %v502 = vpop.f32.mrb[0].mxu0
      %v503 = vadd.f32 0.0, %v502
      %v504 = vpop.f32.mrb[0].mxu0
      %505 = vmatprep.mubr.f32.mxu0 0.0
      %506 = vmatmul.mubr.f32.gmra.mrb[0].mxu0 %v426
      %v507 = vpop.f32.mrb[0].mxu0
      %v508 = vadd.f32 0.0, %v507
      %v509 = vpop.f32.mrb[0].mxu0
      %510 = vmatprep.mubr.f32.mxu0 0.0
      %511 = vmatmul.mubr.f32.gmra.mrb[0].mxu0 %v429
      %v512 = vpop.f32.mrb[0].mxu0
      %v513 = vadd.f32 0.0, %v512
      %v514 = vpop.f32.mrb[0].mxu0
      %515 = vdwg.mxu0
      %516 = vst.msk [vmem:[%s199] sm:$0xff] %vm207, %v498
      %517 = vst.msk [vmem:[%s199 + $0x8] sm:$0xff] %vm207, %v503
      %518 = vst.msk [vmem:[%s199 + $0x10] sm:$0xff] %vm207, %v508
      %519 = vst.msk [vmem:[%s199 + $0x18] sm:$0xff] %vm207, %v513
      %s520 = smul.u32 4, %s15
      %p521 = scmp.lt.s32.totalorder %s520, 7
      %s522 = scalar_select %p521, %s520, 7
      %s523 = smul.addr %s522, 8
      %s524 = scalar_lea.vmem %s4, %s523
      // Predicated region
      $region37: #{tpu_custom_call.1} parent=35 // pred_check
        %p525 = pneg %p122
      $region38: #{tpu_custom_call.1} parent=35 // pred_check_branch
        %527 = sbr.rel (%p525) target = $region40
      $region39: #{tpu_custom_call.1} parent=35 // pred_region
        %s528 = smul.u32 4, %s15
      $region40: #{tpu_custom_call.1} parent=35 // pred_fallthru
        _
    $region36: #{tpu_custom_call.1} parent=5 // pred_fallthru
      _
    %p529 = scmp.le.s32.totalorder 2, %s10
    // Predicated region
    $region41: #{tpu_custom_call.1} parent=5 // pred_check
      %p530 = pneg %p529
    $region42: #{tpu_custom_call.1} parent=5 // pred_check_branch
      %532 = sbr.rel (%p530) target = $region44
    $region43: #{tpu_custom_call.1} parent=5 // pred_region
      %s533 = ssub.s32 %s10, 2
      // Predicated region
      $region45: #{tpu_custom_call.1} parent=43 // pred_check
        %p534 = pneg %p128
      $region46: #{tpu_custom_call.1} parent=43 // pred_check_branch
        %536 = sbr.rel (%p534) target = $region48
      $region47: #{tpu_custom_call.1} parent=43 // pred_region
        %s537 = smul.u32 4, %s16
        %p538 = scmp.lt.s32.totalorder %s537, 7
        %s539 = scalar_select %p538, %s537, 7
        %s540 = smul.addr %s539, 8
        %s541 = scalar_lea.vmem %s4, %s540
      $region48: #{tpu_custom_call.1} parent=43 // pred_fallthru
        _
    $region44: #{tpu_custom_call.1} parent=5 // pred_fallthru
      _
  $region6: #{tpu_custom_call.1} parent=0 // loop_footer
    %s14 = sadd.s32 1, %s10
  $region7: #{tpu_custom_call.1} parent=0 // loop_footer_branch
    %9 = sbr.rel target = $region3
  $region8: #{tpu_custom_call.1} parent=0 // loop_exit
    _

// kernel: tpu_custom_call.1
$region0: #{tpu_custom_call.1}
  #allocation0 [shape = 'u32[]', space=smem, size = 0x4, offset = 0x4, fixed_abs, tag = 'smem constant byte address 0x4 - core index']
  #allocation1 [shape = 'u32[144,128]{1,0:T(1,128)}', space=vmem, size = 0x12000, scoped, tag = 'internal scratch']
  %s0 = inlined_call_operand.vmem [shape: f32[64,16], index: 0, kind: input, shape index: {}]
  %s1 = inlined_call_operand.vmem [shape: f32[16,32], index: 1, kind: input, shape index: {}]
  %s2 = inlined_call_operand.vmem [shape: f32[32,32], index: 2, kind: input, shape index: {}]
  %s3 = inlined_call_operand.vmem [shape: f32[32,16], index: 3, kind: input, shape index: {}]
  %s4 = inlined_call_operand.vmem [shape: f32[64,16], index: 4, kind: output, shape index: {}]
  %s5 = sld [smem:[#allocation0]]
  $region49: #{tpu_custom_call.1} parent=0
    _
  %s7 = ssub.s32 1, %s5
  %s8 = scalar_select 0, %s7, %s5
  loop: start=0, step=1, limit=4
  $region2: #{tpu_custom_call.1} parent=0 // loop_pre_header
    _
  $region3: #{tpu_custom_call.1} parent=0 // loop_header
    %s10 = sphi 0, %s14
    %p11 = scmp.ge.s32.totalorder %s10, 4
    %s20 = sphi 0, %s22
    %s23 = sphi 0, %s20
    %s24 = sphi 0, %s23
    %s40 = sphi 0, %s24
    %s44 = sphi 0, %s44
    %s46 = sphi 0, %s44
    %s47 = sphi 0, %s46
    %s61 = sphi 0, %s47
    %s65 = sphi 0, %s65
    %s67 = sphi 0, %s65
    %s68 = sphi 0, %s67
    %s82 = sphi 0, %s68
    %s86 = sphi 0, %s86
    %s88 = sphi 0, %s86
    %s89 = sphi 0, %s88
    %s103 = sphi 0, %s89
    %s109 = sphi 0, %s111
    %s112 = sphi 0, %s109
    %s113 = sphi 0, %s112
    %s129 = sphi 0, %s113
  $region4: #{tpu_custom_call.1} parent=0 // loop_header_branch
    %13 = sbr.rel (%p11) target = $region8
  $region5: #{tpu_custom_call.1} parent=0 // loop_body
    %s15 = ssub.s32 %s10, 1
    %s16 = ssub.s32 %s10, 2
    %s17 = sadd.s32 %s10, 1
    %s18 = ssub.s32 %s10, %s17
    %p19 = scmp.eq.s32.totalorder %s18, 0
    %s21 = sadd.s32 %s20, 1
    %s22 = scalar_select %p19, %s20, %s21
    %p25 = pneg %p19
    %p26 = scmp.eq.s32.totalorder %s10, 1
    %p27 = por %p25, %p26
    %p28 = scmp.ne.s32.totalorder %s20, %s23
    %p29 = scmp.eq.s32.totalorder %s10, 0
    %p30 = por %p28, %p29
    %p31 = scmp.ne.s32.totalorder %s20, %s23
    %p32 = scmp.eq.s32.totalorder %s15, 1
    %p33 = por %p31, %p32
    %p34 = scmp.ne.s32.totalorder %s23, %s24
    %p35 = scmp.eq.s32.totalorder %s15, 0
    %p36 = por %p34, %p35
    %p37 = scmp.ne.s32.totalorder %s23, %s24
    %p38 = scmp.eq.s32.totalorder %s16, 1
    %p39 = por %p37, %p38
    %p41 = scmp.ne.s32.totalorder %s24, %s40
    %p42 = scmp.eq.s32.totalorder %s16, 0
    %p43 = por %p41, %p42
    %s45 = sadd.s32 %s44, 1
    %p48 = scmp.eq.s32.totalorder %s10, 1
    %p49 = scmp.ne.s32.totalorder %s44, %s46
    %p50 = scmp.eq.s32.totalorder %s10, 0
    %p51 = por %p49, %p50
    %p52 = scmp.ne.s32.totalorder %s44, %s46
    %p53 = scmp.eq.s32.totalorder %s15, 1
    %p54 = por %p52, %p53
    %p55 = scmp.ne.s32.totalorder %s46, %s47
    %p56 = scmp.eq.s32.totalorder %s15, 0
    %p57 = por %p55, %p56
    %p58 = scmp.ne.s32.totalorder %s46, %s47
    %p59 = scmp.eq.s32.totalorder %s16, 1
    %p60 = por %p58, %p59
    %p62 = scmp.ne.s32.totalorder %s47, %s61
    %p63 = scmp.eq.s32.totalorder %s16, 0
    %p64 = por %p62, %p63
    %s66 = sadd.s32 %s65, 1
    %p69 = scmp.eq.s32.totalorder %s10, 1
    %p70 = scmp.ne.s32.totalorder %s65, %s67
    %p71 = scmp.eq.s32.totalorder %s10, 0
    %p72 = por %p70, %p71
    %p73 = scmp.ne.s32.totalorder %s65, %s67
    %p74 = scmp.eq.s32.totalorder %s15, 1
    %p75 = por %p73, %p74
    %p76 = scmp.ne.s32.totalorder %s67, %s68
    %p77 = scmp.eq.s32.totalorder %s15, 0
    %p78 = por %p76, %p77
    %p79 = scmp.ne.s32.totalorder %s67, %s68
    %p80 = scmp.eq.s32.totalorder %s16, 1
    %p81 = por %p79, %p80
    %p83 = scmp.ne.s32.totalorder %s68, %s82
    %p84 = scmp.eq.s32.totalorder %s16, 0
    %p85 = por %p83, %p84
    %s87 = sadd.s32 %s86, 1
    %p90 = scmp.eq.s32.totalorder %s10, 1
    %p91 = scmp.ne.s32.totalorder %s86, %s88
    %p92 = scmp.eq.s32.totalorder %s10, 0
    %p93 = por %p91, %p92
    %p94 = scmp.ne.s32.totalorder %s86, %s88
    %p95 = scmp.eq.s32.totalorder %s15, 1
    %p96 = por %p94, %p95
    %p97 = scmp.ne.s32.totalorder %s88, %s89
    %p98 = scmp.eq.s32.totalorder %s15, 0
    %p99 = por %p97, %p98
    %p100 = scmp.ne.s32.totalorder %s88, %s89
    %p101 = scmp.eq.s32.totalorder %s16, 1
    %p102 = por %p100, %p101
    %p104 = scmp.ne.s32.totalorder %s89, %s103
    %p105 = scmp.eq.s32.totalorder %s16, 0
    %p106 = por %p104, %p105
    %s107 = ssub.s32 %s10, %s17
    %p108 = scmp.eq.s32.totalorder %s107, 0
    %s110 = sadd.s32 %s109, 1
    %s111 = scalar_select %p108, %s109, %s110
    %p114 = pneg %p108
    %p115 = scmp.eq.s32.totalorder %s10, 1
    %p116 = por %p114, %p115
    %p117 = scmp.ne.s32.totalorder %s109, %s112
    %p118 = scmp.eq.s32.totalorder %s10, 0
    %p119 = por %p117, %p118
    %p120 = scmp.ne.s32.totalorder %s109, %s112
    %p121 = scmp.eq.s32.totalorder %s15, 1
    %p122 = por %p120, %p121
    %p123 = scmp.ne.s32.totalorder %s112, %s113
    %p124 = scmp.eq.s32.totalorder %s15, 0
    %p125 = por %p123, %p124
    %p126 = scmp.ne.s32.totalorder %s112, %s113
    %p127 = scmp.eq.s32.totalorder %s16, 1
    %p128 = por %p126, %p127
    %p130 = scmp.ne.s32.totalorder %s113, %s129
    %p131 = scmp.eq.s32.totalorder %s16, 0
    %p132 = por %p130, %p131
    %p133 = scmp.le.s32.totalorder 1, %s10
    %p134 = scmp.lt.s32.totalorder %s10, 3
    %p135 = pnand %p133, %p134
    %p136 = pneg %p135
    // Predicated region
    $region9: #{tpu_custom_call.1} parent=5 // pred_check
      _
    $region10: #{tpu_custom_call.1} parent=5 // pred_check_branch
      %138 = sbr.rel (%p135) target = $region12
    $region11: #{tpu_custom_call.1} parent=5 // pred_region
      %s139 = ssub.s32 %s10, 1
      // Predicated region
      $region13: #{tpu_custom_call.1} parent=11 // pred_check
        %p140 = pneg %p57
      $region14: #{tpu_custom_call.1} parent=11 // pred_check_branch
        %142 = sbr.rel (%p140) target = $region16
      $region15: #{tpu_custom_call.1} parent=11 // pred_region
        _
      $region16: #{tpu_custom_call.1} parent=11 // pred_fallthru
        _
      // Predicated region
      $region17: #{tpu_custom_call.1} parent=11 // pred_check
        %p143 = pneg %p78
      $region18: #{tpu_custom_call.1} parent=11 // pred_check_branch
        %145 = sbr.rel (%p143) target = $region20
      $region19: #{tpu_custom_call.1} parent=11 // pred_region
        _
      $region20: #{tpu_custom_call.1} parent=11 // pred_fallthru
        _
      // Predicated region
      $region21: #{tpu_custom_call.1} parent=11 // pred_check
        %p146 = pneg %p99
      $region22: #{tpu_custom_call.1} parent=11 // pred_check_branch
        %148 = sbr.rel (%p146) target = $region24
      $region23: #{tpu_custom_call.1} parent=11 // pred_region
        _
      $region24: #{tpu_custom_call.1} parent=11 // pred_fallthru
        _
    $region12: #{tpu_custom_call.1} parent=5 // pred_fallthru
      _
    %p149 = scmp.lt.s32.totalorder %s10, 2
    // Predicated region
    $region25: #{tpu_custom_call.1} parent=5 // pred_check
      %p150 = pneg %p149
    $region26: #{tpu_custom_call.1} parent=5 // pred_check_branch
      %152 = sbr.rel (%p150) target = $region28
    $region27: #{tpu_custom_call.1} parent=5 // pred_region
      // Predicated region
      $region29: #{tpu_custom_call.1} parent=27 // pred_check
        %p153 = pneg %p30
      $region30: #{tpu_custom_call.1} parent=27 // pred_check_branch
        %155 = sbr.rel (%p153) target = $region32
      $region31: #{tpu_custom_call.1} parent=27 // pred_region
        %s156 = smul.u32 4, %s10
        %p157 = scmp.lt.s32.totalorder %s156, 7
        %s158 = scalar_select %p157, %s156, 7
        %s159 = smul.addr %s158, 8
        %s160 = scalar_lea.vmem %s0, %s159
        %s161 = smul.u32 4, %s10
      $region32: #{tpu_custom_call.1} parent=27 // pred_fallthru
        _
    $region28: #{tpu_custom_call.1} parent=5 // pred_fallthru
      _
    %p162 = scmp.le.s32.totalorder 1, %s10
    %p163 = scmp.lt.s32.totalorder %s10, 3
    %p164 = pnand %p162, %p163
    %p165 = pneg %p164
    // Predicated region
    $region33: #{tpu_custom_call.1} parent=5 // pred_check
      _
    $region34: #{tpu_custom_call.1} parent=5 // pred_check_branch
      %167 = sbr.rel (%p164) target = $region36
    $region35: #{tpu_custom_call.1} parent=5 // pred_region
      %s168 = ssub.s32 %s10, 1
      %s169 = smul.u32 4, %s15
      %p170 = scmp.lt.s32.totalorder %s169, 7
      %s171 = scalar_select %p170, %s169, 7
      %s172 = smul.addr %s171, 8
      %s173 = scalar_lea.vmem %s0, %s172
      %p174 = pneg %p36
      %p175 = pneg %p33
      %p176 = pneg %p57
      %p177 = pneg %p54
      %p178 = pneg %p78
      %p179 = pneg %p75
      %p180 = pneg %p99
      %p181 = pneg %p96
      %p182 = pneg %p125
      %p183 = pneg %p122
      %s184 = smul.u32 4, %s15
      %p185 = scmp.lt.s32.totalorder %s184, 7
      %s186 = scalar_select %p185, %s184, 7
      %s187 = smul.addr %s186, 8
      %s188 = scalar_lea.vmem %s4, %s187
      %s189 = smul.u32 4, %s15
      %p190 = scmp.lt.s32.totalorder %s189, 7
      %s191 = scalar_select %p190, %s189, 7
      %s192 = smul.addr %s191, 8
      %s193 = scalar_lea.vmem %s0, %s192
      %s194 = smul.u32 4, %s15
      %s195 = smul.u32 4, %s15
      %p196 = scmp.lt.s32.totalorder %s195, 7
      %s197 = scalar_select %p196, %s195, 7
      %s198 = smul.addr %s197, 8
      %s199 = scalar_lea.vmem %s4, %s198
      %s200 = smul.u32 4, %s15
      %v201 = vld [vmem:[%s193] sm:$0xff]
      %v202 = vld [vmem:[%s193 + $0x8] sm:$0xff]
      %v203 = vld [vmem:[%s193 + $0x10] sm:$0xff]
      %v204 = vld [vmem:[%s193 + $0x18] sm:$0xff]
      %v205 = vld [vmem:[%s1] sm:$0xff]
      %v206 = vld [vmem:[%s1 + $0x8] sm:$0xff]
      %vm207 = vcmask 130048
      %v209 = vsel %vm207, %v201, 0
      %v212 = vsel %vm207, %v202, 0
      %v215 = vsel %vm207, %v203, 0
      %v218 = vsel %vm207, %v204, 0
      %220 = vmatprep.subr.mxu0 0.0
      %221 = vmatpush1.msra.mxu0 %v205
      %222 = vmatprep.subr.mxu0 0.0
      %223 = vmatpush1.msra.mxu0 %v206
      %224 = vmatprep.subr.mxu0 0.0
      %225 = vmatpush1.msra.mxu0 0.0
      %226 = vmatprep.subr.mxu0 0.0
      %227 = vmatpush1.msra.mxu0 0.0
      %228 = vmatprep.subr.mxu0 0.0
      %229 = vmatpush1.msra.mxu0 0.0
      %230 = vmatprep.subr.mxu0 0.0
      %231 = vmatpush1.msra.mxu0 0.0
      %232 = vmatprep.subr.mxu0 0.0
      %233 = vmatpush1.msra.mxu0 0.0
      %234 = vmatprep.subr.mxu0 0.0
      %235 = vmatpush1.msra.mxu0 0.0
      %236 = vmatprep.subr.mxu0 0.0
      %237 = vmatpush1.msra.mxu0 0.0
      %238 = vmatprep.subr.mxu0 0.0
      %239 = vmatpush1.msra.mxu0 0.0
      %240 = vmatprep.subr.mxu0 0.0
      %241 = vmatpush1.msra.mxu0 0.0
      %242 = vmatprep.subr.mxu0 0.0
      %243 = vmatpush1.msra.mxu0 0.0
      %244 = vmatprep.subr.mxu0 0.0
      %245 = vmatpush1.msra.mxu0 0.0
      %246 = vmatprep.subr.mxu0 0.0
      %247 = vmatpush1.msra.mxu0 0.0
      %248 = vmatprep.subr.mxu0 0.0
      %249 = vmatpush1.msra.mxu0 0.0
      %250 = vmatprep.subr.mxu0 0.0
      %251 = vmatpush1.msra.mxu0 0.0
      %252 = vmatprep.subr.mxu0 0.0
      %253 = vmatpush1.msra.mxu0 0.0
      %254 = vmatprep.subr.mxu0 0.0
      %255 = vmatpush1.msra.mxu0 0.0
      %256 = vmatprep.subr.mxu0 0.0
      %257 = vmatpush1.msra.mxu0 0.0
      %258 = vmatprep.subr.mxu0 0.0
      %259 = vmatpush1.msra.mxu0 0.0
      %260 = vmatprep.subr.mxu0 0.0
      %261 = vmatpush1.msra.mxu0 0.0
      %262 = vmatprep.subr.mxu0 0.0
      %263 = vmatpush1.msra.mxu0 0.0
      %264 = vmatprep.subr.mxu0 0.0
      %265 = vmatpush1.msra.mxu0 0.0
      %266 = vmatprep.subr.mxu0 0.0
      %267 = vmatpush1.msra.mxu0 0.0
      %268 = vmatprep.subr.mxu0 0.0
      %269 = vmatpush1.msra.mxu0 0.0
      %270 = vmatprep.subr.mxu0 0.0
      %271 = vmatpush1.msra.mxu0 0.0
      %272 = vmatprep.subr.mxu0 0.0
      %273 = vmatpush1.msra.mxu0 0.0
      %274 = vmatprep.subr.mxu0 0.0
      %275 = vmatpush1.msra.mxu0 0.0
      %276 = vmatprep.subr.mxu0 0.0
      %277 = vmatpush1.msra.mxu0 0.0
      %278 = vmatprep.subr.mxu0 0.0
      %279 = vmatpush1.msra.mxu0 0.0
      %280 = vmatprep.subr.mxu0 0.0
      %281 = vmatpush1.msra.mxu0 0.0
      %282 = vmatprep.subr.mxu0 0.0
      %283 = vmatpush1.msra.mxu0 0.0
      %284 = vmatprep.mubr.f32.mxu0 0.0
      %285 = vmatmul.mubr.f32.gmra.mrb[0].mxu0 %v209
      %v286 = vpop.f32.mrb[0].mxu0
      %v287 = vadd.f32 0.0, %v286
      %v288 = vpop.f32.mrb[0].mxu0
      %289 = vmatprep.mubr.f32.mxu0 0.0
      %290 = vmatmul.mubr.f32.gmra.mrb[0].mxu0 %v212
      %v291 = vpop.f32.mrb[0].mxu0
      %v292 = vadd.f32 0.0, %v291
      %v293 = vpop.f32.mrb[0].mxu0
      %294 = vmatprep.mubr.f32.mxu0 0.0
      %295 = vmatmul.mubr.f32.gmra.mrb[0].mxu0 %v215
      %v296 = vpop.f32.mrb[0].mxu0
      %v297 = vadd.f32 0.0, %v296
      %v298 = vpop.f32.mrb[0].mxu0
      %299 = vmatprep.mubr.f32.mxu0 0.0
      %300 = vmatmul.mubr.f32.gmra.mrb[0].mxu0 %v218
      %v301 = vpop.f32.mrb[0].mxu0
      %v302 = vadd.f32 0.0, %v301
      %v303 = vpop.f32.mrb[0].mxu0
      %304 = vdwg.mxu0
      %v305 = vmax.f32 %v287, 0.0
      %v306 = vmax.f32 %v292, 0.0
      %v307 = vmax.f32 %v297, 0.0
      %v308 = vmax.f32 %v302, 0.0
      %v309 = vld [vmem:[%s2] sm:$0xff]
      %v310 = vld [vmem:[%s2 + $0x8] sm:$0xff]
      %v311 = vld [vmem:[%s2 + $0x10] sm:$0xff]
      %v312 = vld [vmem:[%s2 + $0x18] sm:$0xff]
      %vm313 = vcmask 261120
      %v315 = vsel %vm313, %v305, 0
      %v318 = vsel %vm313, %v306, 0
      %v321 = vsel %vm313, %v307, 0
      %v324 = vsel %vm313, %v308, 0
      %326 = vmatprep.subr.mxu0 0.0
      %327 = vmatpush1.msra.mxu0 %v309
      %328 = vmatprep.subr.mxu0 0.0
      %329 = vmatpush1.msra.mxu0 %v310
      %330 = vmatprep.subr.mxu0 0.0
      %331 = vmatpush1.msra.mxu0 %v311
      %332 = vmatprep.subr.mxu0 0.0
      %333 = vmatpush1.msra.mxu0 %v312
      %334 = vmatprep.subr.mxu0 0.0
      %335 = vmatpush1.msra.mxu0 0.0
      %336 = vmatprep.subr.mxu0 0.0
      %337 = vmatpush1.msra.mxu0 0.0
      %338 = vmatprep.subr.mxu0 0.0
      %339 = vmatpush1.msra.mxu0 0.0
      %340 = vmatprep.subr.mxu0 0.0
      %341 = vmatpush1.msra.mxu0 0.0
      %342 = vmatprep.subr.mxu0 0.0
      %343 = vmatpush1.msra.mxu0 0.0
      %344 = vmatprep.subr.mxu0 0.0
      %345 = vmatpush1.msra.mxu0 0.0
      %346 = vmatprep.subr.mxu0 0.0
      %347 = vmatpush1.msra.mxu0 0.0
      %348 = vmatprep.subr.mxu0 0.0
      %349 = vmatpush1.msra.mxu0 0.0
      %350 = vmatprep.subr.mxu0 0.0
      %351 = vmatpush1.msra.mxu0 0.0
      %352 = vmatprep.subr.mxu0 0.0
      %353 = vmatpush1.msra.mxu0 0.0
      %354 = vmatprep.subr.mxu0 0.0
      %355 = vmatpush1.msra.mxu0 0.0
      %356 = vmatprep.subr.mxu0 0.0
      %357 = vmatpush1.msra.mxu0 0.0
      %358 = vmatprep.subr.mxu0 0.0
      %359 = vmatpush1.msra.mxu0 0.0
      %360 = vmatprep.subr.mxu0 0.0
      %361 = vmatpush1.msra.mxu0 0.0
      %362 = vmatprep.subr.mxu0 0.0
      %363 = vmatpush1.msra.mxu0 0.0
      %364 = vmatprep.subr.mxu0 0.0
      %365 = vmatpush1.msra.mxu0 0.0
      %366 = vmatprep.subr.mxu0 0.0
      %367 = vmatpush1.msra.mxu0 0.0
      %368 = vmatprep.subr.mxu0 0.0
      %369 = vmatpush1.msra.mxu0 0.0
      %370 = vmatprep.subr.mxu0 0.0
      %371 = vmatpush1.msra.mxu0 0.0
      %372 = vmatprep.subr.mxu0 0.0
      %373 = vmatpush1.msra.mxu0 0.0
      %374 = vmatprep.subr.mxu0 0.0
      %375 = vmatpush1.msra.mxu0 0.0
      %376 = vmatprep.subr.mxu0 0.0
      %377 = vmatpush1.msra.mxu0 0.0
      %378 = vmatprep.subr.mxu0 0.0
      %379 = vmatpush1.msra.mxu0 0.0
      %380 = vmatprep.subr.mxu0 0.0
      %381 = vmatpush1.msra.mxu0 0.0
      %382 = vmatprep.subr.mxu0 0.0
      %383 = vmatpush1.msra.mxu0 0.0
      %384 = vmatprep.subr.mxu0 0.0
      %385 = vmatpush1.msra.mxu0 0.0
      %386 = vmatprep.subr.mxu0 0.0
      %387 = vmatpush1.msra.mxu0 0.0
      %388 = vmatprep.subr.mxu0 0.0
      %389 = vmatpush1.msra.mxu0 0.0
      %390 = vmatprep.mubr.f32.mxu0 0.0
      %391 = vmatmul.mubr.f32.gmra.mrb[0].mxu0 %v315
      %v392 = vpop.f32.mrb[0].mxu0
      %v393 = vadd.f32 0.0, %v392
      %v394 = vpop.f32.mrb[0].mxu0
      %395 = vmatprep.mubr.f32.mxu0 0.0
      %396 = vmatmul.mubr.f32.gmra.mrb[0].mxu0 %v318
      %v397 = vpop.f32.mrb[0].mxu0
      %v398 = vadd.f32 0.0, %v397
      %v399 = vpop.f32.mrb[0].mxu0
      %400 = vmatprep.mubr.f32.mxu0 0.0
      %401 = vmatmul.mubr.f32.gmra.mrb[0].mxu0 %v321
      %v402 = vpop.f32.mrb[0].mxu0
      %v403 = vadd.f32 0.0, %v402
      %v404 = vpop.f32.mrb[0].mxu0
      %405 = vmatprep.mubr.f32.mxu0 0.0
      %406 = vmatmul.mubr.f32.gmra.mrb[0].mxu0 %v324
      %v407 = vpop.f32.mrb[0].mxu0
      %v408 = vadd.f32 0.0, %v407
      %v409 = vpop.f32.mrb[0].mxu0
      %410 = vdwg.mxu0
      %v411 = vmax.f32 %v393, 0.0
      %v412 = vmax.f32 %v398, 0.0
      %v413 = vmax.f32 %v403, 0.0
      %v414 = vmax.f32 %v408, 0.0
      %v415 = vld [vmem:[%s3] sm:$0xff]
      %v416 = vld [vmem:[%s3 + $0x8] sm:$0xff]
      %v417 = vld [vmem:[%s3 + $0x10] sm:$0xff]
      %v418 = vld [vmem:[%s3 + $0x18] sm:$0xff]
      %v420 = vsel %vm313, %v411, 0
      %v423 = vsel %vm313, %v412, 0
      %v426 = vsel %vm313, %v413, 0
      %v429 = vsel %vm313, %v414, 0
      %431 = vmatprep.subr.mxu0 0.0
      %432 = vmatpush1.msra.mxu0 %v415
      %433 = vmatprep.subr.mxu0 0.0
      %434 = vmatpush1.msra.mxu0 %v416
      %435 = vmatprep.subr.mxu0 0.0
      %436 = vmatpush1.msra.mxu0 %v417
      %437 = vmatprep.subr.mxu0 0.0
      %438 = vmatpush1.msra.mxu0 %v418
      %439 = vmatprep.subr.mxu0 0.0
      %440 = vmatpush1.msra.mxu0 0.0
      %441 = vmatprep.subr.mxu0 0.0
      %442 = vmatpush1.msra.mxu0 0.0
      %443 = vmatprep.subr.mxu0 0.0
      %444 = vmatpush1.msra.mxu0 0.0
      %445 = vmatprep.subr.mxu0 0.0
      %446 = vmatpush1.msra.mxu0 0.0
      %447 = vmatprep.subr.mxu0 0.0
      %448 = vmatpush1.msra.mxu0 0.0
      %449 = vmatprep.subr.mxu0 0.0
      %450 = vmatpush1.msra.mxu0 0.0
      %451 = vmatprep.subr.mxu0 0.0
      %452 = vmatpush1.msra.mxu0 0.0
      %453 = vmatprep.subr.mxu0 0.0
      %454 = vmatpush1.msra.mxu0 0.0
      %455 = vmatprep.subr.mxu0 0.0
      %456 = vmatpush1.msra.mxu0 0.0
      %457 = vmatprep.subr.mxu0 0.0
      %458 = vmatpush1.msra.mxu0 0.0
      %459 = vmatprep.subr.mxu0 0.0
      %460 = vmatpush1.msra.mxu0 0.0
      %461 = vmatprep.subr.mxu0 0.0
      %462 = vmatpush1.msra.mxu0 0.0
      %463 = vmatprep.subr.mxu0 0.0
      %464 = vmatpush1.msra.mxu0 0.0
      %465 = vmatprep.subr.mxu0 0.0
      %466 = vmatpush1.msra.mxu0 0.0
      %467 = vmatprep.subr.mxu0 0.0
      %468 = vmatpush1.msra.mxu0 0.0
      %469 = vmatprep.subr.mxu0 0.0
      %470 = vmatpush1.msra.mxu0 0.0
      %471 = vmatprep.subr.mxu0 0.0
      %472 = vmatpush1.msra.mxu0 0.0
      %473 = vmatprep.subr.mxu0 0.0
      %474 = vmatpush1.msra.mxu0 0.0
      %475 = vmatprep.subr.mxu0 0.0
      %476 = vmatpush1.msra.mxu0 0.0
      %477 = vmatprep.subr.mxu0 0.0
      %478 = vmatpush1.msra.mxu0 0.0
      %479 = vmatprep.subr.mxu0 0.0
      %480 = vmatpush1.msra.mxu0 0.0
      %481 = vmatprep.subr.mxu0 0.0
      %482 = vmatpush1.msra.mxu0 0.0
      %483 = vmatprep.subr.mxu0 0.0
      %484 = vmatpush1.msra.mxu0 0.0
      %485 = vmatprep.subr.mxu0 0.0
      %486 = vmatpush1.msra.mxu0 0.0
      %487 = vmatprep.subr.mxu0 0.0
      %488 = vmatpush1.msra.mxu0 0.0
      %489 = vmatprep.subr.mxu0 0.0
      %490 = vmatpush1.msra.mxu0 0.0
      %491 = vmatprep.subr.mxu0 0.0
      %492 = vmatpush1.msra.mxu0 0.0
      %493 = vmatprep.subr.mxu0 0.0
      %494 = vmatpush1.msra.mxu0 0.0
      %495 = vmatprep.mubr.f32.mxu0 0.0
      %496 = vmatmul.mubr.f32.gmra.mrb[0].mxu0 %v420
      %v497 = vpop.f32.mrb[0].mxu0
      %v498 = vadd.f32 0.0, %v497
      %v499 = vpop.f32.mrb[0].mxu0
      %500 = vmatprep.mubr.f32.mxu0 0.0
      %501 = vmatmul.mubr.f32.gmra.mrb[0].mxu0 %v423
      %v502 = vpop.f32.mrb[0].mxu0
      %v503 = vadd.f32 0.0, %v502
      %v504 = vpop.f32.mrb[0].mxu0
      %505 = vmatprep.mubr.f32.mxu0 0.0
      %506 = vmatmul.mubr.f32.gmra.mrb[0].mxu0 %v426
      %v507 = vpop.f32.mrb[0].mxu0
      %v508 = vadd.f32 0.0, %v507
      %v509 = vpop.f32.mrb[0].mxu0
      %510 = vmatprep.mubr.f32.mxu0 0.0
      %511 = vmatmul.mubr.f32.gmra.mrb[0].mxu0 %v429
      %v512 = vpop.f32.mrb[0].mxu0
      %v513 = vadd.f32 0.0, %v512
      %v514 = vpop.f32.mrb[0].mxu0
      %515 = vdwg.mxu0
      %516 = vst.msk [vmem:[%s199] sm:$0xff] %vm207, %v498
      %517 = vst.msk [vmem:[%s199 + $0x8] sm:$0xff] %vm207, %v503
      %518 = vst.msk [vmem:[%s199 + $0x10] sm:$0xff] %vm207, %v508
      %519 = vst.msk [vmem:[%s199 + $0x18] sm:$0xff] %vm207, %v513
      %s520 = smul.u32 4, %s15
      %p521 = scmp.lt.s32.totalorder %s520, 7
      %s522 = scalar_select %p521, %s520, 7
      %s523 = smul.addr %s522, 8
      %s524 = scalar_lea.vmem %s4, %s523
      // Predicated region
      $region37: #{tpu_custom_call.1} parent=35 // pred_check
        %p525 = pneg %p122
      $region38: #{tpu_custom_call.1} parent=35 // pred_check_branch
        %527 = sbr.rel (%p525) target = $region40
      $region39: #{tpu_custom_call.1} parent=35 // pred_region
        %s528 = smul.u32 4, %s15
      $region40: #{tpu_custom_call.1} parent=35 // pred_fallthru
        _
    $region36: #{tpu_custom_call.1} parent=5 // pred_fallthru
      _
    %p529 = scmp.le.s32.totalorder 2, %s10
    // Predicated region
    $region41: #{tpu_custom_call.1} parent=5 // pred_check
      %p530 = pneg %p529
    $region42: #{tpu_custom_call.1} parent=5 // pred_check_branch
      %532 = sbr.rel (%p530) target = $region44
    $region43: #{tpu_custom_call.1} parent=5 // pred_region
      %s533 = ssub.s32 %s10, 2
      // Predicated region
      $region45: #{tpu_custom_call.1} parent=43 // pred_check
        %p534 = pneg %p128
      $region46: #{tpu_custom_call.1} parent=43 // pred_check_branch
        %536 = sbr.rel (%p534) target = $region48
      $region47: #{tpu_custom_call.1} parent=43 // pred_region
        %s537 = smul.u32 4, %s16
        %p538 = scmp.lt.s32.totalorder %s537, 7
        %s539 = scalar_select %p538, %s537, 7
        %s540 = smul.addr %s539, 8
        %s541 = scalar_lea.vmem %s4, %s540
      $region48: #{tpu_custom_call.1} parent=43 // pred_fallthru
        _
    $region44: #{tpu_custom_call.1} parent=5 // pred_fallthru
      _
  $region6: #{tpu_custom_call.1} parent=0 // loop_footer
    %s14 = sadd.s32 1, %s10
  $region7: #{tpu_custom_call.1} parent=0 // loop_footer_branch
    %9 = sbr.rel target = $region3
  $region8: #{tpu_custom_call.1} parent=0 // loop_exit
    _

</llo_original>
